<compile_context>
chip_gen: v7x
topology: tpu7x:2x2x1
jax: 0.10.0
libtpu: 0.0.40
codegen_flags: <defaults>
</compile_context>

<pallas_src>
import jax
import jax.numpy as jnp
from jax.experimental import pallas as pl
from jax.experimental.pallas import tpu as pltpu

INPUT_SHAPE = 562
OUTPUT_SHAPE = 6
H1, H2, H3 = 256, 64, 16

D_PAD = 640     # 562 padded up to a multiple of 128 (dense lane loads for x / K of fc1)
OUT_PAD = 128   # 6 padded up to one full vreg lane width (unmasked output stores)


def _round_up(n, m):
    return ((n + m - 1) // m) * m


def hapt_dnn_kernel(x_ref,
                    w1_ref, b1_ref,
                    w2_ref, b2_ref,
                    w3_ref, b3_ref,
                    wf_ref, bf_ref,
                    o_ref):
    # fc1: bf16 operands on the MXU, f32 accumulation (dominant matmul).
    h = jnp.dot(x_ref[...], w1_ref[...], preferred_element_type=jnp.float32)
    h = jnp.maximum(h + b1_ref[...], 0.0)                            # relu(fc1)

    h = jnp.dot(h, w2_ref[...], preferred_element_type=jnp.float32) + b2_ref[...]
    h = jnp.maximum(h, 0.0)                                          # relu(fc2)

    h = jnp.dot(h, w3_ref[...], preferred_element_type=jnp.float32) + b3_ref[...]
    h = jnp.maximum(h, 0.0)                                          # relu(fc3)

    out = jnp.dot(h, wf_ref[...], preferred_element_type=jnp.float32) + bf_ref[...]
    o_ref[...] = out.astype(o_ref.dtype)                             # fc_f (no act)


def hapt_dnn_forward(x, params, *, batch_tile=512):
    """x: (B, 562) float32.  params: dict of transposed (in, out) weights + (1, out) biases."""
    B, D = x.shape
    assert D == INPUT_SHAPE

    # Large MXU-friendly batch tile, but keep >= 2 grid steps when possible
    # (v7x has 2 TensorCores) and stay sublane-aligned (multiple of 8).
    tb = min(batch_tile, max(_round_up(pl.cdiv(B, 2), 8), 8))
    B_pad = _round_up(B, tb)
    grid = (B_pad // tb,)

    # Pad + cast inputs / params: dense lane layouts, bf16 MXU operands for fc1.
    x_p = jnp.pad(x, ((0, B_pad - B), (0, D_PAD - D))).astype(jnp.bfloat16)
    w1 = jnp.pad(params["w1"], ((0, D_PAD - D), (0, 0))).astype(jnp.bfloat16)
    b1 = params["b1"]
    w2, b2 = params["w2"], params["b2"]
    w3, b3 = params["w3"], params["b3"]
    wf = jnp.pad(params["wf"], ((0, 0), (0, OUT_PAD - OUTPUT_SHAPE)))
    bf = jnp.pad(params["bf"], ((0, 0), (0, OUT_PAD - OUTPUT_SHAPE)))

    def resident(arr):
        # Constant block index => the pipeline fetches this operand once and it
        # stays VMEM-resident for every grid step (no per-step re-DMA).
        return pl.BlockSpec(arr.shape, lambda i: (0, 0))

    flops = 2 * B_pad * (D_PAD * H1 + H1 * H2 + H2 * H3 + H3 * OUT_PAD)
    bytes_accessed = (
        x_p.size * 2 + B_pad * OUT_PAD * 4          # activations in / out
        + w1.size * 2 + w2.size * 4 + w3.size * 4 + wf.size * 4
        + b1.size * 4 + b2.size * 4 + b3.size * 4 + bf.size * 4
    )

    out = pl.pallas_call(
        hapt_dnn_kernel,
        out_shape=jax.ShapeDtypeStruct((B_pad, OUT_PAD), jnp.float32),
        grid=grid,
        in_specs=[
            pl.BlockSpec((tb, D_PAD), lambda i: (i, 0)),   # x tile (batch-tiled)
            resident(w1), resident(b1),
            resident(w2), resident(b2),
            resident(w3), resident(b3),
            resident(wf), resident(bf),
        ],
        out_specs=pl.BlockSpec((tb, OUT_PAD), lambda i: (i, 0)),
        compiler_params=pltpu.CompilerParams(
            dimension_semantics=("parallel",),
            vmem_limit_bytes=32 * 1024 * 1024,   # headroom for very large batch tiles (v5e default is 16 MiB)
        ),
        cost_estimate=pl.CostEstimate(
            flops=flops, transcendentals=0, bytes_accessed=bytes_accessed),
    )(x_p, w1, b1, w2, b2, w3, b3, wf, bf)

    return out[:B, :OUTPUT_SHAPE]


def init_params(key):
    """Deterministic synthetic parameters with the same shapes as the torch module
    (weights stored transposed: (in, out); biases as (1, out) for 2-D VMEM layout)."""
    ks = jax.random.split(key, 8)

    def layer(kw, kb, fan_in, fan_out):
        # uniform(-1/sqrt(fan_in), 1/sqrt(fan_in)) like torch.nn.Linear default
        bound = 1.0 / (fan_in ** 0.5)
        w = jax.random.uniform(kw, (fan_in, fan_out), jnp.float32, -bound, bound)
        b = jax.random.uniform(kb, (1, fan_out), jnp.float32, -bound, bound)
        return w, b

    w1, b1 = layer(ks[0], ks[1], INPUT_SHAPE, H1)
    w2, b2 = layer(ks[2], ks[3], H1, H2)
    w3, b3 = layer(ks[4], ks[5], H2, H3)
    wf, bf = layer(ks[6], ks[7], H3, OUTPUT_SHAPE)
    return {"w1": w1, "b1": b1, "w2": w2, "b2": b2,
            "w3": w3, "b3": b3, "wf": wf, "bf": bf}


def reference_forward_f32(x, p):
    h = jnp.maximum(x @ p["w1"] + p["b1"], 0.0)
    h = jnp.maximum(h @ p["w2"] + p["b2"], 0.0)
    h = jnp.maximum(h @ p["w3"] + p["b3"], 0.0)
    return h @ p["wf"] + p["bf"]


def reference_forward_bf16_fc1(x, p):
    # Same numerics as the kernel path: bf16 operands on fc1, f32 accumulation.
    h = jnp.dot(x.astype(jnp.bfloat16), p["w1"].astype(jnp.bfloat16),
                preferred_element_type=jnp.float32) + p["b1"]
    h = jnp.maximum(h, 0.0)
    h = jnp.maximum(h @ p["w2"] + p["b2"], 0.0)
    h = jnp.maximum(h @ p["w3"] + p["b3"], 0.0)
    return h @ p["wf"] + p["bf"]


if __name__ == "__main__":
    key = jax.random.PRNGKey(0)
    kx, kp = jax.random.split(key)
    params = init_params(kp)

    # B=64 -> two parallel grid steps; B=37 additionally exercises batch padding.
    for B in (64, 37):
        x = jax.random.normal(jax.random.fold_in(kx, B), (B, INPUT_SHAPE),
                              dtype=jnp.float32)
        out = jax.block_until_ready(hapt_dnn_forward(x, params))
        assert out.shape == (B, OUTPUT_SHAPE)

        ref16 = reference_forward_bf16_fc1(x, params)   # same-precision reference
        ref32 = reference_forward_f32(x, params)        # full-f32 sanity reference
        assert jnp.allclose(out, ref16, atol=2e-3, rtol=2e-3), "mismatch vs bf16-fc1 reference"
        assert jnp.allclose(out, ref32, atol=5e-2, rtol=5e-2), "mismatch vs f32 reference"

    print("KERNEL_OK")
</pallas_src>

<mosaic_0001>
module attributes {stable_mosaic.version = 11 : i64} {
  func.func @hapt_dnn_kernel(%arg0: i32, %arg1: memref<32x640xbf16, #tpu.memory_space<vmem>>, %arg2: memref<640x256xbf16, #tpu.memory_space<vmem>>, %arg3: memref<1x256xf32, #tpu.memory_space<vmem>>, %arg4: memref<256x64xf32, #tpu.memory_space<vmem>>, %arg5: memref<1x64xf32, #tpu.memory_space<vmem>>, %arg6: memref<64x16xf32, #tpu.memory_space<vmem>>, %arg7: memref<1x16xf32, #tpu.memory_space<vmem>>, %arg8: memref<16x128xf32, #tpu.memory_space<vmem>>, %arg9: memref<1x128xf32, #tpu.memory_space<vmem>>, %arg10: memref<32x128xf32, #tpu.memory_space<vmem>>) attributes {dimension_semantics = [#tpu.dimension_semantics<parallel>], iteration_bounds = array<i64: 2>, scalar_prefetch = 0 : i64, scratch_operands = 0 : i64, tpu.core_type = #tpu.core_type<tc>, window_params = [{transform_indices = @transform_0, window_bounds = array<i64: 32, 640>}, {pipeline_mode = #tpu.pipeline_mode<synchronous>, transform_indices = @transform_1, window_bounds = array<i64: 640, 256>}, {pipeline_mode = #tpu.pipeline_mode<synchronous>, transform_indices = @transform_2, window_bounds = array<i64: 1, 256>}, {pipeline_mode = #tpu.pipeline_mode<synchronous>, transform_indices = @transform_3, window_bounds = array<i64: 256, 64>}, {pipeline_mode = #tpu.pipeline_mode<synchronous>, transform_indices = @transform_4, window_bounds = array<i64: 1, 64>}, {pipeline_mode = #tpu.pipeline_mode<synchronous>, transform_indices = @transform_5, window_bounds = array<i64: 64, 16>}, {pipeline_mode = #tpu.pipeline_mode<synchronous>, transform_indices = @transform_6, window_bounds = array<i64: 1, 16>}, {pipeline_mode = #tpu.pipeline_mode<synchronous>, transform_indices = @transform_7, window_bounds = array<i64: 16, 128>}, {pipeline_mode = #tpu.pipeline_mode<synchronous>, transform_indices = @transform_8, window_bounds = array<i64: 1, 128>}, {transform_indices = @transform_9, window_bounds = array<i64: 32, 128>}]} {
    %c0 = arith.constant 0 : index
    %c0_0 = arith.constant 0 : index
    %0 = vector.load %arg1[%c0, %c0_0] : memref<32x640xbf16, #tpu.memory_space<vmem>>, vector<32x640xbf16>
    %c0_1 = arith.constant 0 : index
    %c0_2 = arith.constant 0 : index
    %1 = vector.load %arg2[%c0_1, %c0_2] : memref<640x256xbf16, #tpu.memory_space<vmem>>, vector<640x256xbf16>
    %cst = arith.constant dense<0.000000e+00> : vector<32x256xf32>
    %2 = tpu.matmul %0, %1, %cst {dimension_numbers = #tpu.dot_dimension_numbers<[1], [0], [0], [1], [0, 0, 1, 1], [], []>} : vector<32x640xbf16>, vector<640x256xbf16>, vector<32x256xf32> -> vector<32x256xf32>
    %c0_3 = arith.constant 0 : index
    %c0_4 = arith.constant 0 : index
    %3 = vector.load %arg3[%c0_3, %c0_4] : memref<1x256xf32, #tpu.memory_space<vmem>>, vector<1x256xf32>
    %4 = vector.broadcast %3 : vector<1x256xf32> to vector<32x256xf32>
    %5 = arith.addf %2, %4 : vector<32x256xf32>
    %cst_5 = arith.constant 0.000000e+00 : f32
    %6 = vector.broadcast %cst_5 : f32 to vector<32x256xf32>
    %7 = arith.maximumf %5, %6 : vector<32x256xf32>
    %c0_6 = arith.constant 0 : index
    %c0_7 = arith.constant 0 : index
    %8 = vector.load %arg4[%c0_6, %c0_7] : memref<256x64xf32, #tpu.memory_space<vmem>>, vector<256x64xf32>
    %cst_8 = arith.constant dense<0.000000e+00> : vector<32x64xf32>
    %9 = tpu.matmul %7, %8, %cst_8 {dimension_numbers = #tpu.dot_dimension_numbers<[1], [0], [0], [1], [0, 0, 1, 1], [], []>} : vector<32x256xf32>, vector<256x64xf32>, vector<32x64xf32> -> vector<32x64xf32>
    %c0_9 = arith.constant 0 : index
    %c0_10 = arith.constant 0 : index
    %10 = vector.load %arg5[%c0_9, %c0_10] : memref<1x64xf32, #tpu.memory_space<vmem>>, vector<1x64xf32>
    %11 = vector.broadcast %10 : vector<1x64xf32> to vector<32x64xf32>
    %12 = arith.addf %9, %11 : vector<32x64xf32>
    %cst_11 = arith.constant 0.000000e+00 : f32
    %13 = vector.broadcast %cst_11 : f32 to vector<32x64xf32>
    %14 = arith.maximumf %12, %13 : vector<32x64xf32>
    %c0_12 = arith.constant 0 : index
    %c0_13 = arith.constant 0 : index
    %15 = vector.load %arg6[%c0_12, %c0_13] : memref<64x16xf32, #tpu.memory_space<vmem>>, vector<64x16xf32>
    %cst_14 = arith.constant dense<0.000000e+00> : vector<32x16xf32>
    %16 = tpu.matmul %14, %15, %cst_14 {dimension_numbers = #tpu.dot_dimension_numbers<[1], [0], [0], [1], [0, 0, 1, 1], [], []>} : vector<32x64xf32>, vector<64x16xf32>, vector<32x16xf32> -> vector<32x16xf32>
    %c0_15 = arith.constant 0 : index
    %c0_16 = arith.constant 0 : index
    %17 = vector.load %arg7[%c0_15, %c0_16] : memref<1x16xf32, #tpu.memory_space<vmem>>, vector<1x16xf32>
    %18 = vector.broadcast %17 : vector<1x16xf32> to vector<32x16xf32>
    %19 = arith.addf %16, %18 : vector<32x16xf32>
    %cst_17 = arith.constant 0.000000e+00 : f32
    %20 = vector.broadcast %cst_17 : f32 to vector<32x16xf32>
    %21 = arith.maximumf %19, %20 : vector<32x16xf32>
    %c0_18 = arith.constant 0 : index
    %c0_19 = arith.constant 0 : index
    %22 = vector.load %arg8[%c0_18, %c0_19] : memref<16x128xf32, #tpu.memory_space<vmem>>, vector<16x128xf32>
    %cst_20 = arith.constant dense<0.000000e+00> : vector<32x128xf32>
    %23 = tpu.matmul %21, %22, %cst_20 {dimension_numbers = #tpu.dot_dimension_numbers<[1], [0], [0], [1], [0, 0, 1, 1], [], []>} : vector<32x16xf32>, vector<16x128xf32>, vector<32x128xf32> -> vector<32x128xf32>
    %c0_21 = arith.constant 0 : index
    %c0_22 = arith.constant 0 : index
    %24 = vector.load %arg9[%c0_21, %c0_22] : memref<1x128xf32, #tpu.memory_space<vmem>>, vector<1x128xf32>
    %25 = vector.broadcast %24 : vector<1x128xf32> to vector<32x128xf32>
    %26 = arith.addf %23, %25 : vector<32x128xf32>
    %c0_23 = arith.constant 0 : index
    %c0_24 = arith.constant 0 : index
    %27 = vector.load %arg10[%c0_23, %c0_24] : memref<32x128xf32, #tpu.memory_space<vmem>>, vector<32x128xf32>
    tpu.vector_store %arg10[%c0_23, %c0_24], %26 {strides = array<i32>} : memref<32x128xf32, #tpu.memory_space<vmem>>, vector<32x128xf32>,
    return
  }
  func.func @transform_0(%arg0: i32) -> (i32, i32) {
    %c0_i32 = arith.constant 0 : i32
    %c0_i32_0 = arith.constant 0 : i32
    return %arg0, %c0_i32 : i32, i32
  }
  func.func @transform_1(%arg0: i32) -> (i32, i32) {
    %c0_i32 = arith.constant 0 : i32
    %c0_i32_0 = arith.constant 0 : i32
    %c0_i32_1 = arith.constant 0 : i32
    return %c0_i32, %c0_i32_0 : i32, i32
  }
  func.func @transform_2(%arg0: i32) -> (i32, i32) {
    %c0_i32 = arith.constant 0 : i32
    %c0_i32_0 = arith.constant 0 : i32
    %c0_i32_1 = arith.constant 0 : i32
    return %c0_i32, %c0_i32_0 : i32, i32
  }
  func.func @transform_3(%arg0: i32) -> (i32, i32) {
    %c0_i32 = arith.constant 0 : i32
    %c0_i32_0 = arith.constant 0 : i32
    %c0_i32_1 = arith.constant 0 : i32
    return %c0_i32, %c0_i32_0 : i32, i32
  }
  func.func @transform_4(%arg0: i32) -> (i32, i32) {
    %c0_i32 = arith.constant 0 : i32
    %c0_i32_0 = arith.constant 0 : i32
    %c0_i32_1 = arith.constant 0 : i32
    return %c0_i32, %c0_i32_0 : i32, i32
  }
  func.func @transform_5(%arg0: i32) -> (i32, i32) {
    %c0_i32 = arith.constant 0 : i32
    %c0_i32_0 = arith.constant 0 : i32
    %c0_i32_1 = arith.constant 0 : i32
    return %c0_i32, %c0_i32_0 : i32, i32
  }
  func.func @transform_6(%arg0: i32) -> (i32, i32) {
    %c0_i32 = arith.constant 0 : i32
    %c0_i32_0 = arith.constant 0 : i32
    %c0_i32_1 = arith.constant 0 : i32
    return %c0_i32, %c0_i32_0 : i32, i32
  }
  func.func @transform_7(%arg0: i32) -> (i32, i32) {
    %c0_i32 = arith.constant 0 : i32
    %c0_i32_0 = arith.constant 0 : i32
    %c0_i32_1 = arith.constant 0 : i32
    return %c0_i32, %c0_i32_0 : i32, i32
  }
  func.func @transform_8(%arg0: i32) -> (i32, i32) {
    %c0_i32 = arith.constant 0 : i32
    %c0_i32_0 = arith.constant 0 : i32
    %c0_i32_1 = arith.constant 0 : i32
    return %c0_i32, %c0_i32_0 : i32, i32
  }
  func.func @transform_9(%arg0: i32) -> (i32, i32) {
    %c0_i32 = arith.constant 0 : i32
    %c0_i32_0 = arith.constant 0 : i32
    return %arg0, %c0_i32 : i32, i32
  }
}

</mosaic_0001>

<llo_original>
// kernel: tpu_custom_call.1
$region0: #{tpu_custom_call.1}
  #allocation0 [shape = 'u32[]', space=smem, size = 0x4, offset = 0x4, fixed_abs, tag = 'smem constant byte address 0x4 - core index']
  #allocation1 [shape = 'u32[144,128]{1,0:T(1,128)}', space=vmem, size = 0x12000, scoped, tag = 'internal scratch']
  %s0 = inlined_call_operand.vmem [shape: bf16[64,640], index: 0, kind: input, shape index: {}]
  %s1 = inlined_call_operand.hbm [shape: bf16[640,256], index: 1, kind: input, shape index: {}]
  %s2 = inlined_call_operand.vmem [shape: f32[1,256], index: 2, kind: input, shape index: {}]
  %s3 = inlined_call_operand.vmem [shape: f32[256,64], index: 3, kind: input, shape index: {}]
  %s4 = inlined_call_operand.vmem [shape: f32[1,64], index: 4, kind: input, shape index: {}]
  %s5 = inlined_call_operand.vmem [shape: f32[64,16], index: 5, kind: input, shape index: {}]
  %s6 = inlined_call_operand.vmem [shape: f32[1,16], index: 6, kind: input, shape index: {}]
  %s7 = inlined_call_operand.vmem [shape: f32[16,128], index: 7, kind: input, shape index: {}]
  %s8 = inlined_call_operand.vmem [shape: f32[1,128], index: 8, kind: input, shape index: {}]
  %s9 = inlined_call_operand.hbm [shape: f32[64,128], index: 9, kind: output, shape index: {}]
  %s10 = sld [smem:[#allocation0]]
  $region73: #{tpu_custom_call.1} parent=0
    _
  %s12 = ssub.s32 1, %s10
  %s13 = scalar_select 0, %s12, %s10
  $region1: #{tpu_custom_call.1} parent=0
    #allocation2 [shape = 'u8[327680]{0}', space=vmem, size = 0x50000, scoped, tag = 'input window, operand 1, single buffered']
    #allocation3 [shape = 's32[2]{0}', space=sflag, size = 0x8, scoped, tag = 'scoped memory for tpu_custom_call.1']
    #allocation4 [shape = 's32[2]{0}', space=sflag, size = 0x8, scoped, tag = 'scoped memory for tpu_custom_call.1']
    #allocation5 [shape = 'u8[32768]{0}', space=vmem, size = 0x8000, scoped, tag = 'output window, operand 0']
    %14 = vsyncpa [#allocation3], 0
    %15 = vsyncpa [#allocation4], 0
    %s16 = scalar_lea.sflag [#allocation4], 1
    %17 = vsyncpa %s16, 0
    loop: start=0, step=1, limit=4
    $region2: #{tpu_custom_call.1} parent=1 // loop_pre_header
      _
    $region3: #{tpu_custom_call.1} parent=1 // loop_header
      %s19 = sphi 0, %s23
      %p20 = scmp.ge.s32.totalorder %s19, 4
      %s29 = sphi 0, %s31
      %s32 = sphi 0, %s29
      %s33 = sphi 0, %s32
      %s49 = sphi 0, %s33
      %s53 = sphi 0, %s53
      %s55 = sphi 0, %s53
      %s56 = sphi 0, %s55
      %s70 = sphi 0, %s56
      %s74 = sphi 0, %s74
      %s76 = sphi 0, %s74
      %s77 = sphi 0, %s76
      %s91 = sphi 0, %s77
      %s95 = sphi 0, %s95
      %s97 = sphi 0, %s95
      %s98 = sphi 0, %s97
      %s112 = sphi 0, %s98
      %s116 = sphi 0, %s116
      %s118 = sphi 0, %s116
      %s119 = sphi 0, %s118
      %s133 = sphi 0, %s119
      %s137 = sphi 0, %s137
      %s139 = sphi 0, %s137
      %s140 = sphi 0, %s139
      %s154 = sphi 0, %s140
      %s158 = sphi 0, %s158
      %s160 = sphi 0, %s158
      %s161 = sphi 0, %s160
      %s175 = sphi 0, %s161
      %s179 = sphi 0, %s179
      %s181 = sphi 0, %s179
      %s182 = sphi 0, %s181
      %s196 = sphi 0, %s182
      %s200 = sphi 0, %s200
      %s202 = sphi 0, %s200
      %s203 = sphi 0, %s202
      %s217 = sphi 0, %s203
      %s223 = sphi 0, %s225
      %s226 = sphi 0, %s223
      %s227 = sphi 0, %s226
      %s243 = sphi 0, %s227
    $region4: #{tpu_custom_call.1} parent=1 // loop_header_branch
      %22 = sbr.rel (%p20) target = $region8
    $region5: #{tpu_custom_call.1} parent=1 // loop_body
      %s24 = ssub.s32 %s19, 1
      %s25 = ssub.s32 %s19, 2
      %s26 = sadd.s32 %s19, 1
      %s27 = ssub.s32 %s19, %s26
      %p28 = scmp.eq.s32.totalorder %s27, 0
      %s30 = sadd.s32 %s29, 1
      %s31 = scalar_select %p28, %s29, %s30
      %p34 = pneg %p28
      %p35 = scmp.eq.s32.totalorder %s19, 1
      %p36 = por %p34, %p35
      %p37 = scmp.ne.s32.totalorder %s29, %s32
      %p38 = scmp.eq.s32.totalorder %s19, 0
      %p39 = por %p37, %p38
      %p40 = scmp.ne.s32.totalorder %s29, %s32
      %p41 = scmp.eq.s32.totalorder %s24, 1
      %p42 = por %p40, %p41
      %p43 = scmp.ne.s32.totalorder %s32, %s33
      %p44 = scmp.eq.s32.totalorder %s24, 0
      %p45 = por %p43, %p44
      %p46 = scmp.ne.s32.totalorder %s32, %s33
      %p47 = scmp.eq.s32.totalorder %s25, 1
      %p48 = por %p46, %p47
      %p50 = scmp.ne.s32.totalorder %s33, %s49
      %p51 = scmp.eq.s32.totalorder %s25, 0
      %p52 = por %p50, %p51
      %s54 = sadd.s32 %s53, 1
      %p57 = scmp.eq.s32.totalorder %s19, 1
      %p58 = scmp.ne.s32.totalorder %s53, %s55
      %p59 = scmp.eq.s32.totalorder %s19, 0
      %p60 = por %p58, %p59
      %p61 = scmp.ne.s32.totalorder %s53, %s55
      %p62 = scmp.eq.s32.totalorder %s24, 1
      %p63 = por %p61, %p62
      %p64 = scmp.ne.s32.totalorder %s55, %s56
      %p65 = scmp.eq.s32.totalorder %s24, 0
      %p66 = por %p64, %p65
      %p67 = scmp.ne.s32.totalorder %s55, %s56
      %p68 = scmp.eq.s32.totalorder %s25, 1
      %p69 = por %p67, %p68
      %p71 = scmp.ne.s32.totalorder %s56, %s70
      %p72 = scmp.eq.s32.totalorder %s25, 0
      %p73 = por %p71, %p72
      %s75 = sadd.s32 %s74, 1
      %p78 = scmp.eq.s32.totalorder %s19, 1
      %p79 = scmp.ne.s32.totalorder %s74, %s76
      %p80 = scmp.eq.s32.totalorder %s19, 0
      %p81 = por %p79, %p80
      %p82 = scmp.ne.s32.totalorder %s74, %s76
      %p83 = scmp.eq.s32.totalorder %s24, 1
      %p84 = por %p82, %p83
      %p85 = scmp.ne.s32.totalorder %s76, %s77
      %p86 = scmp.eq.s32.totalorder %s24, 0
      %p87 = por %p85, %p86
      %p88 = scmp.ne.s32.totalorder %s76, %s77
      %p89 = scmp.eq.s32.totalorder %s25, 1
      %p90 = por %p88, %p89
      %p92 = scmp.ne.s32.totalorder %s77, %s91
      %p93 = scmp.eq.s32.totalorder %s25, 0
      %p94 = por %p92, %p93
      %s96 = sadd.s32 %s95, 1
      %p99 = scmp.eq.s32.totalorder %s19, 1
      %p100 = scmp.ne.s32.totalorder %s95, %s97
      %p101 = scmp.eq.s32.totalorder %s19, 0
      %p102 = por %p100, %p101
      %p103 = scmp.ne.s32.totalorder %s95, %s97
      %p104 = scmp.eq.s32.totalorder %s24, 1
      %p105 = por %p103, %p104
      %p106 = scmp.ne.s32.totalorder %s97, %s98
      %p107 = scmp.eq.s32.totalorder %s24, 0
      %p108 = por %p106, %p107
      %p109 = scmp.ne.s32.totalorder %s97, %s98
      %p110 = scmp.eq.s32.totalorder %s25, 1
      %p111 = por %p109, %p110
      %p113 = scmp.ne.s32.totalorder %s98, %s112
      %p114 = scmp.eq.s32.totalorder %s25, 0
      %p115 = por %p113, %p114
      %s117 = sadd.s32 %s116, 1
      %p120 = scmp.eq.s32.totalorder %s19, 1
      %p121 = scmp.ne.s32.totalorder %s116, %s118
      %p122 = scmp.eq.s32.totalorder %s19, 0
      %p123 = por %p121, %p122
      %p124 = scmp.ne.s32.totalorder %s116, %s118
      %p125 = scmp.eq.s32.totalorder %s24, 1
      %p126 = por %p124, %p125
      %p127 = scmp.ne.s32.totalorder %s118, %s119
      %p128 = scmp.eq.s32.totalorder %s24, 0
      %p129 = por %p127, %p128
      %p130 = scmp.ne.s32.totalorder %s118, %s119
      %p131 = scmp.eq.s32.totalorder %s25, 1
      %p132 = por %p130, %p131
      %p134 = scmp.ne.s32.totalorder %s119, %s133
      %p135 = scmp.eq.s32.totalorder %s25, 0
      %p136 = por %p134, %p135
      %s138 = sadd.s32 %s137, 1
      %p141 = scmp.eq.s32.totalorder %s19, 1
      %p142 = scmp.ne.s32.totalorder %s137, %s139
      %p143 = scmp.eq.s32.totalorder %s19, 0
      %p144 = por %p142, %p143
      %p145 = scmp.ne.s32.totalorder %s137, %s139
      %p146 = scmp.eq.s32.totalorder %s24, 1
      %p147 = por %p145, %p146
      %p148 = scmp.ne.s32.totalorder %s139, %s140
      %p149 = scmp.eq.s32.totalorder %s24, 0
      %p150 = por %p148, %p149
      %p151 = scmp.ne.s32.totalorder %s139, %s140
      %p152 = scmp.eq.s32.totalorder %s25, 1
      %p153 = por %p151, %p152
      %p155 = scmp.ne.s32.totalorder %s140, %s154
      %p156 = scmp.eq.s32.totalorder %s25, 0
      %p157 = por %p155, %p156
      %s159 = sadd.s32 %s158, 1
      %p162 = scmp.eq.s32.totalorder %s19, 1
      %p163 = scmp.ne.s32.totalorder %s158, %s160
      %p164 = scmp.eq.s32.totalorder %s19, 0
      %p165 = por %p163, %p164
      %p166 = scmp.ne.s32.totalorder %s158, %s160
      %p167 = scmp.eq.s32.totalorder %s24, 1
      %p168 = por %p166, %p167
      %p169 = scmp.ne.s32.totalorder %s160, %s161
      %p170 = scmp.eq.s32.totalorder %s24, 0
      %p171 = por %p169, %p170
      %p172 = scmp.ne.s32.totalorder %s160, %s161
      %p173 = scmp.eq.s32.totalorder %s25, 1
      %p174 = por %p172, %p173
      %p176 = scmp.ne.s32.totalorder %s161, %s175
      %p177 = scmp.eq.s32.totalorder %s25, 0
      %p178 = por %p176, %p177
      %s180 = sadd.s32 %s179, 1
      %p183 = scmp.eq.s32.totalorder %s19, 1
      %p184 = scmp.ne.s32.totalorder %s179, %s181
      %p185 = scmp.eq.s32.totalorder %s19, 0
      %p186 = por %p184, %p185
      %p187 = scmp.ne.s32.totalorder %s179, %s181
      %p188 = scmp.eq.s32.totalorder %s24, 1
      %p189 = por %p187, %p188
      %p190 = scmp.ne.s32.totalorder %s181, %s182
      %p191 = scmp.eq.s32.totalorder %s24, 0
      %p192 = por %p190, %p191
      %p193 = scmp.ne.s32.totalorder %s181, %s182
      %p194 = scmp.eq.s32.totalorder %s25, 1
      %p195 = por %p193, %p194
      %p197 = scmp.ne.s32.totalorder %s182, %s196
      %p198 = scmp.eq.s32.totalorder %s25, 0
      %p199 = por %p197, %p198
      %s201 = sadd.s32 %s200, 1
      %p204 = scmp.eq.s32.totalorder %s19, 1
      %p205 = scmp.ne.s32.totalorder %s200, %s202
      %p206 = scmp.eq.s32.totalorder %s19, 0
      %p207 = por %p205, %p206
      %p208 = scmp.ne.s32.totalorder %s200, %s202
      %p209 = scmp.eq.s32.totalorder %s24, 1
      %p210 = por %p208, %p209
      %p211 = scmp.ne.s32.totalorder %s202, %s203
      %p212 = scmp.eq.s32.totalorder %s24, 0
      %p213 = por %p211, %p212
      %p214 = scmp.ne.s32.totalorder %s202, %s203
      %p215 = scmp.eq.s32.totalorder %s25, 1
      %p216 = por %p214, %p215
      %p218 = scmp.ne.s32.totalorder %s203, %s217
      %p219 = scmp.eq.s32.totalorder %s25, 0
      %p220 = por %p218, %p219
      %s221 = ssub.s32 %s19, %s26
      %p222 = scmp.eq.s32.totalorder %s221, 0
      %s224 = sadd.s32 %s223, 1
      %s225 = scalar_select %p222, %s223, %s224
      %p228 = pneg %p222
      %p229 = scmp.eq.s32.totalorder %s19, 1
      %p230 = por %p228, %p229
      %p231 = scmp.ne.s32.totalorder %s223, %s226
      %p232 = scmp.eq.s32.totalorder %s19, 0
      %p233 = por %p231, %p232
      %p234 = scmp.ne.s32.totalorder %s223, %s226
      %p235 = scmp.eq.s32.totalorder %s24, 1
      %p236 = por %p234, %p235
      %p237 = scmp.ne.s32.totalorder %s226, %s227
      %p238 = scmp.eq.s32.totalorder %s24, 0
      %p239 = por %p237, %p238
      %p240 = scmp.ne.s32.totalorder %s226, %s227
      %p241 = scmp.eq.s32.totalorder %s25, 1
      %p242 = por %p240, %p241
      %p244 = scmp.ne.s32.totalorder %s227, %s243
      %p245 = scmp.eq.s32.totalorder %s25, 0
      %p246 = por %p244, %p245
      %p247 = scmp.le.s32.totalorder 1, %s19
      %p248 = scmp.lt.s32.totalorder %s19, 3
      %p249 = pnand %p247, %p248
      %p250 = pneg %p249
      // Predicated region
      $region9: #{tpu_custom_call.1} parent=5 // pred_check
        _
      $region10: #{tpu_custom_call.1} parent=5 // pred_check_branch
        %252 = sbr.rel (%p249) target = $region12
      $region11: #{tpu_custom_call.1} parent=5 // pred_region
        %s253 = ssub.s32 %s19, 1
        // Predicated region
        $region13: #{tpu_custom_call.1} parent=11 // pred_check
          %p254 = pneg %p66
        $region14: #{tpu_custom_call.1} parent=11 // pred_check_branch
          %256 = sbr.rel (%p254) target = $region16
        $region15: #{tpu_custom_call.1} parent=11 // pred_region
          %s258 = ssub.s32 10240, 10240
          %259 = vsyncadd [#allocation3], %s258
          %s260 = sshll.u32 [#allocation2], 4
          %s261 = int_to_ptr.vmem [resolvable:$true] %s260
          %266 = dma.hbm_to_vmem [thread:$0]  %s1, 10240, %s261, [#allocation3], 128, 128, 8
        $region16: #{tpu_custom_call.1} parent=11 // pred_fallthru
          _
        // Predicated region
        $region17: #{tpu_custom_call.1} parent=11 // pred_check
          %p267 = pneg %p87
        $region18: #{tpu_custom_call.1} parent=11 // pred_check_branch
          %269 = sbr.rel (%p267) target = $region20
        $region19: #{tpu_custom_call.1} parent=11 // pred_region
          _
        $region20: #{tpu_custom_call.1} parent=11 // pred_fallthru
          _
        // Predicated region
        $region21: #{tpu_custom_call.1} parent=11 // pred_check
          %p270 = pneg %p108
        $region22: #{tpu_custom_call.1} parent=11 // pred_check_branch
          %272 = sbr.rel (%p270) target = $region24
        $region23: #{tpu_custom_call.1} parent=11 // pred_region
          _
        $region24: #{tpu_custom_call.1} parent=11 // pred_fallthru
          _
        // Predicated region
        $region25: #{tpu_custom_call.1} parent=11 // pred_check
          %p273 = pneg %p129
        $region26: #{tpu_custom_call.1} parent=11 // pred_check_branch
          %275 = sbr.rel (%p273) target = $region28
        $region27: #{tpu_custom_call.1} parent=11 // pred_region
          _
        $region28: #{tpu_custom_call.1} parent=11 // pred_fallthru
          _
        // Predicated region
        $region29: #{tpu_custom_call.1} parent=11 // pred_check
          %p276 = pneg %p150
        $region30: #{tpu_custom_call.1} parent=11 // pred_check_branch
          %278 = sbr.rel (%p276) target = $region32
        $region31: #{tpu_custom_call.1} parent=11 // pred_region
          _
        $region32: #{tpu_custom_call.1} parent=11 // pred_fallthru
          _
        // Predicated region
        $region33: #{tpu_custom_call.1} parent=11 // pred_check
          %p279 = pneg %p171
        $region34: #{tpu_custom_call.1} parent=11 // pred_check_branch
          %281 = sbr.rel (%p279) target = $region36
        $region35: #{tpu_custom_call.1} parent=11 // pred_region
          _
        $region36: #{tpu_custom_call.1} parent=11 // pred_fallthru
          _
        // Predicated region
        $region37: #{tpu_custom_call.1} parent=11 // pred_check
          %p282 = pneg %p192
        $region38: #{tpu_custom_call.1} parent=11 // pred_check_branch
          %284 = sbr.rel (%p282) target = $region40
        $region39: #{tpu_custom_call.1} parent=11 // pred_region
          _
        $region40: #{tpu_custom_call.1} parent=11 // pred_fallthru
          _
        // Predicated region
        $region41: #{tpu_custom_call.1} parent=11 // pred_check
          %p285 = pneg %p213
        $region42: #{tpu_custom_call.1} parent=11 // pred_check_branch
          %287 = sbr.rel (%p285) target = $region44
        $region43: #{tpu_custom_call.1} parent=11 // pred_region
          _
        $region44: #{tpu_custom_call.1} parent=11 // pred_fallthru
          _
      $region12: #{tpu_custom_call.1} parent=5 // pred_fallthru
        _
      %p288 = scmp.lt.s32.totalorder %s19, 2
      // Predicated region
      $region45: #{tpu_custom_call.1} parent=5 // pred_check
        %p289 = pneg %p288
      $region46: #{tpu_custom_call.1} parent=5 // pred_check_branch
        %291 = sbr.rel (%p289) target = $region48
      $region47: #{tpu_custom_call.1} parent=5 // pred_region
        // Predicated region
        $region49: #{tpu_custom_call.1} parent=47 // pred_check
          %p292 = pneg %p39
        $region50: #{tpu_custom_call.1} parent=47 // pred_check_branch
          %294 = sbr.rel (%p292) target = $region52
        $region51: #{tpu_custom_call.1} parent=47 // pred_region
          %s295 = smul.u32 4, %s19
          %p296 = scmp.lt.s32.totalorder %s295, 7
          %s297 = scalar_select %p296, %s295, 7
          %s298 = smul.addr %s297, 5
          %s299 = smul.addr %s298, 4
          %s300 = scalar_lea.vmem %s0, %s299
          %s301 = smul.u32 4, %s19
        $region52: #{tpu_custom_call.1} parent=47 // pred_fallthru
          _
      $region48: #{tpu_custom_call.1} parent=5 // pred_fallthru
        _
      %p302 = scmp.le.s32.totalorder 1, %s19
      %p303 = scmp.lt.s32.totalorder %s19, 3
      %p304 = pnand %p302, %p303
      %p305 = pneg %p304
      // Predicated region
      $region53: #{tpu_custom_call.1} parent=5 // pred_check
        _
      $region54: #{tpu_custom_call.1} parent=5 // pred_check_branch
        %307 = sbr.rel (%p304) target = $region56
      $region55: #{tpu_custom_call.1} parent=5 // pred_region
        %s308 = ssub.s32 %s19, 1
        // Predicated region
        $region57: #{tpu_custom_call.1} parent=55 // pred_check
          %p309 = pneg %p66
        $region58: #{tpu_custom_call.1} parent=55 // pred_check_branch
          %311 = sbr.rel (%p309) target = $region60
        $region59: #{tpu_custom_call.1} parent=55 // pred_region
          %312 = dma.done [#allocation3], 10240
        $region60: #{tpu_custom_call.1} parent=55 // pred_fallthru
          _
        %s313 = smul.u32 4, %s24
        %p314 = scmp.lt.s32.totalorder %s313, 7
        %s315 = scalar_select %p314, %s313, 7
        %s316 = smul.addr %s315, 5
        %s317 = smul.addr %s316, 4
        %s318 = scalar_lea.vmem %s0, %s317
        %p319 = pneg %p45
        %p320 = pneg %p42
        %p321 = pneg %p66
        %p322 = pneg %p63
        %p323 = pneg %p87
        %p324 = pneg %p84
        %p325 = pneg %p108
        %p326 = pneg %p105
        %p327 = pneg %p129
        %p328 = pneg %p126
        %p329 = pneg %p150
        %p330 = pneg %p147
        %p331 = pneg %p171
        %p332 = pneg %p168
        %p333 = pneg %p192
        %p334 = pneg %p189
        %p335 = pneg %p213
        %p336 = pneg %p210
        %p337 = pneg %p239
        %p338 = pneg %p236
        %s339 = sand.u32 %s226, 1
        %s340 = scalar_lea.sflag [#allocation4], %s339
        %s341 = sand.u32 %s226, 1
        %s342 = smul.addr %s341, 32
        %s343 = scalar_lea.vmem [#allocation5], %s342
        %s344 = smul.u32 4, %s24
        %p345 = scmp.lt.s32.totalorder %s344, 7
        %s346 = scalar_select %p345, %s344, 7
        %s347 = smul.addr %s346, 5
        %s348 = smul.addr %s347, 4
        %s349 = scalar_lea.vmem %s0, %s348
        %s350 = smul.u32 4, %s24
        %s351 = smul.u32 4, %s24
        %v353 = vld [vmem:[%s349] sm:$0xff]
        %v354 = vld [vmem:[%s349 + $0x8] sm:$0xff]
        %v355 = vld [vmem:[%s349 + $0x10] sm:$0xf]
        %v356 = vld [vmem:[%s349 + $0x14] sm:$0xff]
        %v357 = vld [vmem:[%s349 + $0x1c] sm:$0xff]
        %v358 = vld [vmem:[%s349 + $0x24] sm:$0xf]
        %v359 = vld [vmem:[%s349 + $0x28] sm:$0xff]
        %v360 = vld [vmem:[%s349 + $0x30] sm:$0xff]
        %v361 = vld [vmem:[%s349 + $0x38] sm:$0xf]
        %v362 = vld [vmem:[%s349 + $0x3c] sm:$0xff]
        %v363 = vld [vmem:[%s349 + $0x44] sm:$0xff]
        %v364 = vld [vmem:[%s349 + $0x4c] sm:$0xf]
        %v365 = vld [vmem:[#allocation2] sm:$0xff]
        %v366 = vld [vmem:[#allocation2 + $0x8] sm:$0xff]
        %v367 = vld [vmem:[#allocation2 + $0x10] sm:$0xff]
        %v368 = vld [vmem:[#allocation2 + $0x18] sm:$0xff]
        %v369 = vld [vmem:[#allocation2 + $0x20] sm:$0xff]
        %v370 = vld [vmem:[#allocation2 + $0x28] sm:$0xff]
        %v371 = vld [vmem:[#allocation2 + $0x30] sm:$0xff]
        %v372 = vld [vmem:[#allocation2 + $0x38] sm:$0xff]
        %v373 = vld [vmem:[#allocation2 + $0x40] sm:$0xff]
        %v374 = vld [vmem:[#allocation2 + $0x48] sm:$0xff]
        %v375 = vld [vmem:[#allocation2 + $0x50] sm:$0xff]
        %v376 = vld [vmem:[#allocation2 + $0x58] sm:$0xff]
        %v377 = vld [vmem:[#allocation2 + $0x60] sm:$0xff]
        %v378 = vld [vmem:[#allocation2 + $0x68] sm:$0xff]
        %v379 = vld [vmem:[#allocation2 + $0x70] sm:$0xff]
        %v380 = vld [vmem:[#allocation2 + $0x78] sm:$0xff]
        %v381 = vld [vmem:[#allocation2 + $0x80] sm:$0xff]
        %v382 = vld [vmem:[#allocation2 + $0x88] sm:$0xff]
        %v383 = vld [vmem:[#allocation2 + $0x90] sm:$0xff]
        %v384 = vld [vmem:[#allocation2 + $0x98] sm:$0xff]
        %v385 = vld [vmem:[#allocation2 + $0xa0] sm:$0xff]
        %v386 = vld [vmem:[#allocation2 + $0xa8] sm:$0xff]
        %v387 = vld [vmem:[#allocation2 + $0xb0] sm:$0xff]
        %v388 = vld [vmem:[#allocation2 + $0xb8] sm:$0xff]
        %v389 = vld [vmem:[#allocation2 + $0xc0] sm:$0xff]
        %v390 = vld [vmem:[#allocation2 + $0xc8] sm:$0xff]
        %v391 = vld [vmem:[#allocation2 + $0xd0] sm:$0xff]
        %v392 = vld [vmem:[#allocation2 + $0xd8] sm:$0xff]
        %v393 = vld [vmem:[#allocation2 + $0xe0] sm:$0xff]
        %v394 = vld [vmem:[#allocation2 + $0xe8] sm:$0xff]
        %v395 = vld [vmem:[#allocation2 + $0xf0] sm:$0xff]
        %v396 = vld [vmem:[#allocation2 + $0xf8] sm:$0xff]
        %v397 = vld [vmem:[#allocation2 + $0x100] sm:$0xff]
        %v398 = vld [vmem:[#allocation2 + $0x108] sm:$0xff]
        %v399 = vld [vmem:[#allocation2 + $0x110] sm:$0xff]
        %v400 = vld [vmem:[#allocation2 + $0x118] sm:$0xff]
        %v401 = vld [vmem:[#allocation2 + $0x120] sm:$0xff]
        %v402 = vld [vmem:[#allocation2 + $0x128] sm:$0xff]
        %v403 = vld [vmem:[#allocation2 + $0x130] sm:$0xff]
        %v404 = vld [vmem:[#allocation2 + $0x138] sm:$0xff]
        %v405 = vld [vmem:[#allocation2 + $0x140] sm:$0xff]
        %v406 = vld [vmem:[#allocation2 + $0x148] sm:$0xff]
        %v407 = vld [vmem:[#allocation2 + $0x150] sm:$0xff]
        %v408 = vld [vmem:[#allocation2 + $0x158] sm:$0xff]
        %v409 = vld [vmem:[#allocation2 + $0x160] sm:$0xff]
        %v410 = vld [vmem:[#allocation2 + $0x168] sm:$0xff]
        %v411 = vld [vmem:[#allocation2 + $0x170] sm:$0xff]
        %v412 = vld [vmem:[#allocation2 + $0x178] sm:$0xff]
        %v413 = vld [vmem:[#allocation2 + $0x180] sm:$0xff]
        %v414 = vld [vmem:[#allocation2 + $0x188] sm:$0xff]
        %v415 = vld [vmem:[#allocation2 + $0x190] sm:$0xff]
        %v416 = vld [vmem:[#allocation2 + $0x198] sm:$0xff]
        %v417 = vld [vmem:[#allocation2 + $0x1a0] sm:$0xff]
        %v418 = vld [vmem:[#allocation2 + $0x1a8] sm:$0xff]
        %v419 = vld [vmem:[#allocation2 + $0x1b0] sm:$0xff]
        %v420 = vld [vmem:[#allocation2 + $0x1b8] sm:$0xff]
        %v421 = vld [vmem:[#allocation2 + $0x1c0] sm:$0xff]
        %v422 = vld [vmem:[#allocation2 + $0x1c8] sm:$0xff]
        %v423 = vld [vmem:[#allocation2 + $0x1d0] sm:$0xff]
        %v424 = vld [vmem:[#allocation2 + $0x1d8] sm:$0xff]
        %v425 = vld [vmem:[#allocation2 + $0x1e0] sm:$0xff]
        %v426 = vld [vmem:[#allocation2 + $0x1e8] sm:$0xff]
        %v427 = vld [vmem:[#allocation2 + $0x1f0] sm:$0xff]
        %v428 = vld [vmem:[#allocation2 + $0x1f8] sm:$0xff]
        %v429 = vld [vmem:[#allocation2 + $0x200] sm:$0xff]
        %v430 = vld [vmem:[#allocation2 + $0x208] sm:$0xff]
        %v431 = vld [vmem:[#allocation2 + $0x210] sm:$0xff]
        %v432 = vld [vmem:[#allocation2 + $0x218] sm:$0xff]
        %v433 = vld [vmem:[#allocation2 + $0x220] sm:$0xff]
        %v434 = vld [vmem:[#allocation2 + $0x228] sm:$0xff]
        %v435 = vld [vmem:[#allocation2 + $0x230] sm:$0xff]
        %v436 = vld [vmem:[#allocation2 + $0x238] sm:$0xff]
        %v437 = vld [vmem:[#allocation2 + $0x240] sm:$0xff]
        %v438 = vld [vmem:[#allocation2 + $0x248] sm:$0xff]
        %v439 = vld [vmem:[#allocation2 + $0x250] sm:$0xff]
        %v440 = vld [vmem:[#allocation2 + $0x258] sm:$0xff]
        %v441 = vld [vmem:[#allocation2 + $0x260] sm:$0xff]
        %v442 = vld [vmem:[#allocation2 + $0x268] sm:$0xff]
        %v443 = vld [vmem:[#allocation2 + $0x270] sm:$0xff]
        %v444 = vld [vmem:[#allocation2 + $0x278] sm:$0xff]
        %v445 = vld [vmem:[%s2] sm:$0x3]
        %v447 = vlaneseq
        %v448 = vshrl.u32 %v447, 7
        %v449 = vsub.s32 0, %v448
        %v450 = vrot.slane %v445, %v449
        %v451 = vlaneseq
        %v452 = vshrl.u32 %v451, 7
        %v453 = vsub.s32 1, %v452
        %v454 = vrot.slane %v445, %v453
        %v469 = vunpack.c.l.b16 %v353
        %v470 = vunpack.c.h.b16 %v353
        %v471 = vunpack.c.l.b16 %v354
        %v472 = vunpack.c.h.b16 %v354
        %v473 = vunpack.c.l.b16 %v355
        %v474 = vunpack.c.l.b16 %v356
        %v475 = vunpack.c.h.b16 %v356
        %v476 = vunpack.c.l.b16 %v357
        %v477 = vunpack.c.h.b16 %v357
        %v478 = vunpack.c.l.b16 %v358
        %v479 = vunpack.c.l.b16 %v359
        %v480 = vunpack.c.h.b16 %v359
        %v481 = vunpack.c.l.b16 %v360
        %v482 = vunpack.c.h.b16 %v360
        %v483 = vunpack.c.l.b16 %v361
        %v484 = vunpack.c.l.b16 %v362
        %v485 = vunpack.c.h.b16 %v362
        %v486 = vunpack.c.l.b16 %v363
        %v487 = vunpack.c.h.b16 %v363
        %v488 = vunpack.c.l.b16 %v364
        %v489 = vpack.c.b16 %v474, %v469
        %v490 = vpack.c.b16 %v475, %v470
        %v491 = vpack.c.b16 %v476, %v471
        %v492 = vpack.c.b16 %v477, %v472
        %v493 = vpack.c.b16 %v478, %v473
        %v494 = vpack.c.b16 %v484, %v479
        %v495 = vpack.c.b16 %v485, %v480
        %v496 = vpack.c.b16 %v486, %v481
        %v497 = vpack.c.b16 %v487, %v482
        %v498 = vpack.c.b16 %v488, %v483
        %v589 = vunpack.c.l.b16 %v365
        %v590 = vunpack.c.h.b16 %v365
        %v591 = vunpack.c.l.b16 %v366
        %v592 = vunpack.c.h.b16 %v366
        %v593 = vunpack.c.l.b16 %v367
        %v594 = vunpack.c.h.b16 %v367
        %v595 = vunpack.c.l.b16 %v368
        %v596 = vunpack.c.h.b16 %v368
        %v597 = vunpack.c.l.b16 %v369
        %v598 = vunpack.c.h.b16 %v369
        %v599 = vunpack.c.l.b16 %v370
        %v600 = vunpack.c.h.b16 %v370
        %v601 = vunpack.c.l.b16 %v371
        %v602 = vunpack.c.h.b16 %v371
        %v603 = vunpack.c.l.b16 %v372
        %v604 = vunpack.c.h.b16 %v372
        %v605 = vunpack.c.l.b16 %v373
        %v606 = vunpack.c.h.b16 %v373
        %v607 = vunpack.c.l.b16 %v374
        %v608 = vunpack.c.h.b16 %v374
        %v609 = vunpack.c.l.b16 %v375
        %v610 = vunpack.c.h.b16 %v375
        %v611 = vunpack.c.l.b16 %v376
        %v612 = vunpack.c.h.b16 %v376
        %v613 = vunpack.c.l.b16 %v377
        %v614 = vunpack.c.h.b16 %v377
        %v615 = vunpack.c.l.b16 %v378
        %v616 = vunpack.c.h.b16 %v378
        %v617 = vunpack.c.l.b16 %v379
        %v618 = vunpack.c.h.b16 %v379
        %v619 = vunpack.c.l.b16 %v380
        %v620 = vunpack.c.h.b16 %v380
        %v621 = vunpack.c.l.b16 %v381
        %v622 = vunpack.c.h.b16 %v381
        %v623 = vunpack.c.l.b16 %v382
        %v624 = vunpack.c.h.b16 %v382
        %v625 = vunpack.c.l.b16 %v383
        %v626 = vunpack.c.h.b16 %v383
        %v627 = vunpack.c.l.b16 %v384
        %v628 = vunpack.c.h.b16 %v384
        %v629 = vunpack.c.l.b16 %v385
        %v630 = vunpack.c.h.b16 %v385
        %v631 = vunpack.c.l.b16 %v386
        %v632 = vunpack.c.h.b16 %v386
        %v633 = vunpack.c.l.b16 %v387
        %v634 = vunpack.c.h.b16 %v387
        %v635 = vunpack.c.l.b16 %v388
        %v636 = vunpack.c.h.b16 %v388
        %v637 = vunpack.c.l.b16 %v389
        %v638 = vunpack.c.h.b16 %v389
        %v639 = vunpack.c.l.b16 %v390
        %v640 = vunpack.c.h.b16 %v390
        %v641 = vunpack.c.l.b16 %v391
        %v642 = vunpack.c.h.b16 %v391
        %v643 = vunpack.c.l.b16 %v392
        %v644 = vunpack.c.h.b16 %v392
        %v645 = vunpack.c.l.b16 %v393
        %v646 = vunpack.c.h.b16 %v393
        %v647 = vunpack.c.l.b16 %v394
        %v648 = vunpack.c.h.b16 %v394
        %v649 = vunpack.c.l.b16 %v395
        %v650 = vunpack.c.h.b16 %v395
        %v651 = vunpack.c.l.b16 %v396
        %v652 = vunpack.c.h.b16 %v396
        %v653 = vunpack.c.l.b16 %v397
        %v654 = vunpack.c.h.b16 %v397
        %v655 = vunpack.c.l.b16 %v398
        %v656 = vunpack.c.h.b16 %v398
        %v657 = vunpack.c.l.b16 %v399
        %v658 = vunpack.c.h.b16 %v399
        %v659 = vunpack.c.l.b16 %v400
        %v660 = vunpack.c.h.b16 %v400
        %v661 = vunpack.c.l.b16 %v401
        %v662 = vunpack.c.h.b16 %v401
        %v663 = vunpack.c.l.b16 %v402
        %v664 = vunpack.c.h.b16 %v402
        %v665 = vunpack.c.l.b16 %v403
        %v666 = vunpack.c.h.b16 %v403
        %v667 = vunpack.c.l.b16 %v404
        %v668 = vunpack.c.h.b16 %v404
        %v669 = vunpack.c.l.b16 %v405
        %v670 = vunpack.c.h.b16 %v405
        %v671 = vunpack.c.l.b16 %v406
        %v672 = vunpack.c.h.b16 %v406
        %v673 = vunpack.c.l.b16 %v407
        %v674 = vunpack.c.h.b16 %v407
        %v675 = vunpack.c.l.b16 %v408
        %v676 = vunpack.c.h.b16 %v408
        %v677 = vunpack.c.l.b16 %v409
        %v678 = vunpack.c.h.b16 %v409
        %v679 = vunpack.c.l.b16 %v410
        %v680 = vunpack.c.h.b16 %v410
        %v681 = vunpack.c.l.b16 %v411
        %v682 = vunpack.c.h.b16 %v411
        %v683 = vunpack.c.l.b16 %v412
        %v684 = vunpack.c.h.b16 %v412
        %v685 = vunpack.c.l.b16 %v413
        %v686 = vunpack.c.h.b16 %v413
        %v687 = vunpack.c.l.b16 %v414
        %v688 = vunpack.c.h.b16 %v414
        %v689 = vunpack.c.l.b16 %v415
        %v690 = vunpack.c.h.b16 %v415
        %v691 = vunpack.c.l.b16 %v416
        %v692 = vunpack.c.h.b16 %v416
        %v693 = vunpack.c.l.b16 %v417
        %v694 = vunpack.c.h.b16 %v417
        %v695 = vunpack.c.l.b16 %v418
        %v696 = vunpack.c.h.b16 %v418
        %v697 = vunpack.c.l.b16 %v419
        %v698 = vunpack.c.h.b16 %v419
        %v699 = vunpack.c.l.b16 %v420
        %v700 = vunpack.c.h.b16 %v420
        %v701 = vunpack.c.l.b16 %v421
        %v702 = vunpack.c.h.b16 %v421
        %v703 = vunpack.c.l.b16 %v422
        %v704 = vunpack.c.h.b16 %v422
        %v705 = vunpack.c.l.b16 %v423
        %v706 = vunpack.c.h.b16 %v423
        %v707 = vunpack.c.l.b16 %v424
        %v708 = vunpack.c.h.b16 %v424
        %v709 = vunpack.c.l.b16 %v425
        %v710 = vunpack.c.h.b16 %v425
        %v711 = vunpack.c.l.b16 %v426
        %v712 = vunpack.c.h.b16 %v426
        %v713 = vunpack.c.l.b16 %v427
        %v714 = vunpack.c.h.b16 %v427
        %v715 = vunpack.c.l.b16 %v428
        %v716 = vunpack.c.h.b16 %v428
        %v717 = vunpack.c.l.b16 %v429
        %v718 = vunpack.c.h.b16 %v429
        %v719 = vunpack.c.l.b16 %v430
        %v720 = vunpack.c.h.b16 %v430
        %v721 = vunpack.c.l.b16 %v431
        %v722 = vunpack.c.h.b16 %v431
        %v723 = vunpack.c.l.b16 %v432
        %v724 = vunpack.c.h.b16 %v432
        %v725 = vunpack.c.l.b16 %v433
        %v726 = vunpack.c.h.b16 %v433
        %v727 = vunpack.c.l.b16 %v434
        %v728 = vunpack.c.h.b16 %v434
        %v729 = vunpack.c.l.b16 %v435
        %v730 = vunpack.c.h.b16 %v435
        %v731 = vunpack.c.l.b16 %v436
        %v732 = vunpack.c.h.b16 %v436
        %v733 = vunpack.c.l.b16 %v437
        %v734 = vunpack.c.h.b16 %v437
        %v735 = vunpack.c.l.b16 %v438
        %v736 = vunpack.c.h.b16 %v438
        %v737 = vunpack.c.l.b16 %v439
        %v738 = vunpack.c.h.b16 %v439
        %v739 = vunpack.c.l.b16 %v440
        %v740 = vunpack.c.h.b16 %v440
        %v741 = vunpack.c.l.b16 %v441
        %v742 = vunpack.c.h.b16 %v441
        %v743 = vunpack.c.l.b16 %v442
        %v744 = vunpack.c.h.b16 %v442
        %v745 = vunpack.c.l.b16 %v443
        %v746 = vunpack.c.h.b16 %v443
        %v747 = vunpack.c.l.b16 %v444
        %v748 = vunpack.c.h.b16 %v444
        %v749 = vpack.c.b16 %v591, %v589
        %v750 = vpack.c.b16 %v592, %v590
        %v751 = vpack.c.b16 %v595, %v593
        %v752 = vpack.c.b16 %v596, %v594
        %v753 = vpack.c.b16 %v599, %v597
        %v754 = vpack.c.b16 %v600, %v598
        %v755 = vpack.c.b16 %v603, %v601
        %v756 = vpack.c.b16 %v604, %v602
        %v757 = vpack.c.b16 %v607, %v605
        %v758 = vpack.c.b16 %v608, %v606
        %v759 = vpack.c.b16 %v611, %v609
        %v760 = vpack.c.b16 %v612, %v610
        %v761 = vpack.c.b16 %v615, %v613
        %v762 = vpack.c.b16 %v616, %v614
        %v763 = vpack.c.b16 %v619, %v617
        %v764 = vpack.c.b16 %v620, %v618
        %v765 = vpack.c.b16 %v623, %v621
        %v766 = vpack.c.b16 %v624, %v622
        %v767 = vpack.c.b16 %v627, %v625
        %v768 = vpack.c.b16 %v628, %v626
        %v769 = vpack.c.b16 %v631, %v629
        %v770 = vpack.c.b16 %v632, %v630
        %v771 = vpack.c.b16 %v635, %v633
        %v772 = vpack.c.b16 %v636, %v634
        %v773 = vpack.c.b16 %v639, %v637
        %v774 = vpack.c.b16 %v640, %v638
        %v775 = vpack.c.b16 %v643, %v641
        %v776 = vpack.c.b16 %v644, %v642
        %v777 = vpack.c.b16 %v647, %v645
        %v778 = vpack.c.b16 %v648, %v646
        %v779 = vpack.c.b16 %v651, %v649
        %v780 = vpack.c.b16 %v652, %v650
        %v781 = vpack.c.b16 %v655, %v653
        %v782 = vpack.c.b16 %v656, %v654
        %v783 = vpack.c.b16 %v659, %v657
        %v784 = vpack.c.b16 %v660, %v658
        %v785 = vpack.c.b16 %v663, %v661
        %v786 = vpack.c.b16 %v664, %v662
        %v787 = vpack.c.b16 %v667, %v665
        %v788 = vpack.c.b16 %v668, %v666
        %v789 = vpack.c.b16 %v671, %v669
        %v790 = vpack.c.b16 %v672, %v670
        %v791 = vpack.c.b16 %v675, %v673
        %v792 = vpack.c.b16 %v676, %v674
        %v793 = vpack.c.b16 %v679, %v677
        %v794 = vpack.c.b16 %v680, %v678
        %v795 = vpack.c.b16 %v683, %v681
        %v796 = vpack.c.b16 %v684, %v682
        %v797 = vpack.c.b16 %v687, %v685
        %v798 = vpack.c.b16 %v688, %v686
        %v799 = vpack.c.b16 %v691, %v689
        %v800 = vpack.c.b16 %v692, %v690
        %v801 = vpack.c.b16 %v695, %v693
        %v802 = vpack.c.b16 %v696, %v694
        %v803 = vpack.c.b16 %v699, %v697
        %v804 = vpack.c.b16 %v700, %v698
        %v805 = vpack.c.b16 %v703, %v701
        %v806 = vpack.c.b16 %v704, %v702
        %v807 = vpack.c.b16 %v707, %v705
        %v808 = vpack.c.b16 %v708, %v706
        %v809 = vpack.c.b16 %v711, %v709
        %v810 = vpack.c.b16 %v712, %v710
        %v811 = vpack.c.b16 %v715, %v713
        %v812 = vpack.c.b16 %v716, %v714
        %v813 = vpack.c.b16 %v719, %v717
        %v814 = vpack.c.b16 %v720, %v718
        %v815 = vpack.c.b16 %v723, %v721
        %v816 = vpack.c.b16 %v724, %v722
        %v817 = vpack.c.b16 %v727, %v725
        %v818 = vpack.c.b16 %v728, %v726
        %v819 = vpack.c.b16 %v731, %v729
        %v820 = vpack.c.b16 %v732, %v730
        %v821 = vpack.c.b16 %v735, %v733
        %v822 = vpack.c.b16 %v736, %v734
        %v823 = vpack.c.b16 %v739, %v737
        %v824 = vpack.c.b16 %v740, %v738
        %v825 = vpack.c.b16 %v743, %v741
        %v826 = vpack.c.b16 %v744, %v742
        %v827 = vpack.c.b16 %v747, %v745
        %v828 = vpack.c.b16 %v748, %v746
        %909 = vmatprep.subr.bf16.mxu0 %v750
        %910 = vmatpush1.bf16.msra.mxu0 %v749
        %911 = vmatprep.subr.bf16.mxu0 %v752
        %912 = vmatpush1.bf16.msra.mxu0 %v751
        %913 = vmatprep.subr.bf16.mxu0 %v754
        %914 = vmatpush1.bf16.msra.mxu0 %v753
        %915 = vmatprep.subr.bf16.mxu0 %v756
        %916 = vmatpush1.bf16.msra.mxu0 %v755
        %917 = vmatprep.subr.bf16.mxu0 %v758
        %918 = vmatpush1.bf16.msra.mxu0 %v757
        %919 = vmatprep.subr.bf16.mxu0 %v760
        %920 = vmatpush1.bf16.msra.mxu0 %v759
        %921 = vmatprep.subr.bf16.mxu0 %v762
        %922 = vmatpush1.bf16.msra.mxu0 %v761
        %923 = vmatprep.subr.bf16.mxu0 %v764
        %924 = vmatpush1.bf16.msra.mxu0 %v763
        %925 = vmatprep.subr.bf16.mxu0 %v766
        %926 = vmatpush1.bf16.msra.mxu0 %v765
        %927 = vmatprep.subr.bf16.mxu0 %v768
        %928 = vmatpush1.bf16.msra.mxu0 %v767
        %929 = vmatprep.subr.bf16.mxu0 %v770
        %930 = vmatpush1.bf16.msra.mxu0 %v769
        %931 = vmatprep.subr.bf16.mxu0 %v772
        %932 = vmatpush1.bf16.msra.mxu0 %v771
        %933 = vmatprep.subr.bf16.mxu0 %v774
        %934 = vmatpush1.bf16.msra.mxu0 %v773
        %935 = vmatprep.subr.bf16.mxu0 %v776
        %936 = vmatpush1.bf16.msra.mxu0 %v775
        %937 = vmatprep.subr.bf16.mxu0 %v778
        %938 = vmatpush1.bf16.msra.mxu0 %v777
        %939 = vmatprep.subr.bf16.mxu0 %v780
        %940 = vmatpush1.bf16.msra.mxu0 %v779
        %941 = vmatprep.mubr.bf16.mxu0 %v490
        %942 = vmatmul.mubr.bf16.gmra.mrb[0].mxu0 %v489
        %v943 = vpop.f32.mrb[0].mxu0
        %v944 = vadd.f32 %v450, %v943
        %v945 = vpop.f32.mrb[0].mxu0
        %v946 = vadd.f32 %v454, %v945
        %v947 = vpop.f32.mrb[0].mxu0
        %v948 = vadd.f32 %v450, %v947
        %v949 = vpop.f32.mrb[0].mxu0
        %v950 = vadd.f32 %v454, %v949
        %951 = vmatprep.mubr.bf16.mxu0 %v495
        %952 = vmatmul.mubr.bf16.gmra.mrb[0].mxu0 %v494
        %v953 = vpop.f32.mrb[0].mxu0
        %v954 = vadd.f32 %v450, %v953
        %v955 = vpop.f32.mrb[0].mxu0
        %v956 = vadd.f32 %v454, %v955
        %v957 = vpop.f32.mrb[0].mxu0
        %v958 = vadd.f32 %v450, %v957
        %v959 = vpop.f32.mrb[0].mxu0
        %v960 = vadd.f32 %v454, %v959
        %961 = vdwg.mxu0
        %962 = vmatprep.subr.bf16.mxu0 %v782
        %963 = vmatpush1.bf16.msra.mxu0 %v781
        %964 = vmatprep.subr.bf16.mxu0 %v784
        %965 = vmatpush1.bf16.msra.mxu0 %v783
        %966 = vmatprep.subr.bf16.mxu0 %v786
        %967 = vmatpush1.bf16.msra.mxu0 %v785
        %968 = vmatprep.subr.bf16.mxu0 %v788
        %969 = vmatpush1.bf16.msra.mxu0 %v787
        %970 = vmatprep.subr.bf16.mxu0 %v790
        %971 = vmatpush1.bf16.msra.mxu0 %v789
        %972 = vmatprep.subr.bf16.mxu0 %v792
        %973 = vmatpush1.bf16.msra.mxu0 %v791
        %974 = vmatprep.subr.bf16.mxu0 %v794
        %975 = vmatpush1.bf16.msra.mxu0 %v793
        %976 = vmatprep.subr.bf16.mxu0 %v796
        %977 = vmatpush1.bf16.msra.mxu0 %v795
        %978 = vmatprep.subr.bf16.mxu0 %v798
        %979 = vmatpush1.bf16.msra.mxu0 %v797
        %980 = vmatprep.subr.bf16.mxu0 %v800
        %981 = vmatpush1.bf16.msra.mxu0 %v799
        %982 = vmatprep.subr.bf16.mxu0 %v802
        %983 = vmatpush1.bf16.msra.mxu0 %v801
        %984 = vmatprep.subr.bf16.mxu0 %v804
        %985 = vmatpush1.bf16.msra.mxu0 %v803
        %986 = vmatprep.subr.bf16.mxu0 %v806
        %987 = vmatpush1.bf16.msra.mxu0 %v805
        %988 = vmatprep.subr.bf16.mxu0 %v808
        %989 = vmatpush1.bf16.msra.mxu0 %v807
        %990 = vmatprep.subr.bf16.mxu0 %v810
        %991 = vmatpush1.bf16.msra.mxu0 %v809
        %992 = vmatprep.subr.bf16.mxu0 %v812
        %993 = vmatpush1.bf16.msra.mxu0 %v811
        %994 = vmatprep.mubr.bf16.mxu0 %v492
        %995 = vmatmul.mubr.bf16.gmra.mrb[0].mxu0 %v491
        %v996 = vpop.f32.mrb[0].mxu0
        %v997 = vadd.f32 %v944, %v996
        %v998 = vpop.f32.mrb[0].mxu0
        %v999 = vadd.f32 %v946, %v998
        %v1000 = vpop.f32.mrb[0].mxu0
        %v1001 = vadd.f32 %v948, %v1000
        %v1002 = vpop.f32.mrb[0].mxu0
        %v1003 = vadd.f32 %v950, %v1002
        %1004 = vmatprep.mubr.bf16.mxu0 %v497
        %1005 = vmatmul.mubr.bf16.gmra.mrb[0].mxu0 %v496
        %v1006 = vpop.f32.mrb[0].mxu0
        %v1007 = vadd.f32 %v954, %v1006
        %v1008 = vpop.f32.mrb[0].mxu0
        %v1009 = vadd.f32 %v956, %v1008
        %v1010 = vpop.f32.mrb[0].mxu0
        %v1011 = vadd.f32 %v958, %v1010
        %v1012 = vpop.f32.mrb[0].mxu0
        %v1013 = vadd.f32 %v960, %v1012
        %1014 = vdwg.mxu0
        %1015 = vmatprep.subr.bf16.mxu0 %v814
        %1016 = vmatpush1.bf16.msra.mxu0 %v813
        %1017 = vmatprep.subr.bf16.mxu0 %v816
        %1018 = vmatpush1.bf16.msra.mxu0 %v815
        %1019 = vmatprep.subr.bf16.mxu0 %v818
        %1020 = vmatpush1.bf16.msra.mxu0 %v817
        %1021 = vmatprep.subr.bf16.mxu0 %v820
        %1022 = vmatpush1.bf16.msra.mxu0 %v819
        %1023 = vmatprep.subr.bf16.mxu0 %v822
        %1024 = vmatpush1.bf16.msra.mxu0 %v821
        %1025 = vmatprep.subr.bf16.mxu0 %v824
        %1026 = vmatpush1.bf16.msra.mxu0 %v823
        %1027 = vmatprep.subr.bf16.mxu0 %v826
        %1028 = vmatpush1.bf16.msra.mxu0 %v825
        %1029 = vmatprep.subr.bf16.mxu0 %v828
        %1030 = vmatpush1.bf16.msra.mxu0 %v827
        %1031 = vmatprep.subr.bf16.mxu0 0
        %1032 = vmatpush1.bf16.msra.mxu0 0
        %1033 = vmatprep.subr.bf16.mxu0 0
        %1034 = vmatpush1.bf16.msra.mxu0 0
        %1035 = vmatprep.subr.bf16.mxu0 0
        %1036 = vmatpush1.bf16.msra.mxu0 0
        %1037 = vmatprep.subr.bf16.mxu0 0
        %1038 = vmatpush1.bf16.msra.mxu0 0
        %1039 = vmatprep.subr.bf16.mxu0 0
        %1040 = vmatpush1.bf16.msra.mxu0 0
        %1041 = vmatprep.subr.bf16.mxu0 0
        %1042 = vmatpush1.bf16.msra.mxu0 0
        %1043 = vmatprep.subr.bf16.mxu0 0
        %1044 = vmatpush1.bf16.msra.mxu0 0
        %1045 = vmatprep.subr.bf16.mxu0 0
        %1046 = vmatpush1.bf16.msra.mxu0 0
        %1047 = vmatprep.mubr.bf16.mxu0 0
        %1048 = vmatmul.mubr.bf16.gmra.mrb[0].mxu0 %v493
        %v1049 = vpop.f32.mrb[0].mxu0
        %v1050 = vadd.f32 %v997, %v1049
        %v1051 = vpop.f32.mrb[0].mxu0
        %v1052 = vadd.f32 %v999, %v1051
        %v1053 = vpop.f32.mrb[0].mxu0
        %v1054 = vadd.f32 %v1001, %v1053
        %v1055 = vpop.f32.mrb[0].mxu0
        %v1056 = vadd.f32 %v1003, %v1055
        %1057 = vmatprep.mubr.bf16.mxu0 0
        %1058 = vmatmul.mubr.bf16.gmra.mrb[0].mxu0 %v498
        %v1059 = vpop.f32.mrb[0].mxu0
        %v1060 = vadd.f32 %v1007, %v1059
        %v1061 = vpop.f32.mrb[0].mxu0
        %v1062 = vadd.f32 %v1009, %v1061
        %v1063 = vpop.f32.mrb[0].mxu0
        %v1064 = vadd.f32 %v1011, %v1063
        %v1065 = vpop.f32.mrb[0].mxu0
        %v1066 = vadd.f32 %v1013, %v1065
        %1067 = vdwg.mxu0
        %v1068 = vmax.f32 %v1050, 0.0
        %v1069 = vmax.f32 %v1052, 0.0
        %v1070 = vmax.f32 %v1054, 0.0
        %v1071 = vmax.f32 %v1056, 0.0
        %v1072 = vmax.f32 %v1060, 0.0
        %v1073 = vmax.f32 %v1062, 0.0
        %v1074 = vmax.f32 %v1064, 0.0
        %v1075 = vmax.f32 %v1066, 0.0
        %v1076 = vld [vmem:[%s3] sm:$0xff]
        %v1077 = vld [vmem:[%s3 + $0x8] sm:$0xff]
        %v1078 = vld [vmem:[%s3 + $0x10] sm:$0xff]
        %v1079 = vld [vmem:[%s3 + $0x18] sm:$0xff]
        %v1080 = vld [vmem:[%s3 + $0x20] sm:$0xff]
        %v1081 = vld [vmem:[%s3 + $0x28] sm:$0xff]
        %v1082 = vld [vmem:[%s3 + $0x30] sm:$0xff]
        %v1083 = vld [vmem:[%s3 + $0x38] sm:$0xff]
        %v1084 = vld [vmem:[%s3 + $0x40] sm:$0xff]
        %v1085 = vld [vmem:[%s3 + $0x48] sm:$0xff]
        %v1086 = vld [vmem:[%s3 + $0x50] sm:$0xff]
        %v1087 = vld [vmem:[%s3 + $0x58] sm:$0xff]
        %v1088 = vld [vmem:[%s3 + $0x60] sm:$0xff]
        %v1089 = vld [vmem:[%s3 + $0x68] sm:$0xff]
        %v1090 = vld [vmem:[%s3 + $0x70] sm:$0xff]
        %v1091 = vld [vmem:[%s3 + $0x78] sm:$0xff]
        %v1092 = vld [vmem:[%s3 + $0x80] sm:$0xff]
        %v1093 = vld [vmem:[%s3 + $0x88] sm:$0xff]
        %v1094 = vld [vmem:[%s3 + $0x90] sm:$0xff]
        %v1095 = vld [vmem:[%s3 + $0x98] sm:$0xff]
        %v1096 = vld [vmem:[%s3 + $0xa0] sm:$0xff]
        %v1097 = vld [vmem:[%s3 + $0xa8] sm:$0xff]
        %v1098 = vld [vmem:[%s3 + $0xb0] sm:$0xff]
        %v1099 = vld [vmem:[%s3 + $0xb8] sm:$0xff]
        %v1100 = vld [vmem:[%s3 + $0xc0] sm:$0xff]
        %v1101 = vld [vmem:[%s3 + $0xc8] sm:$0xff]
        %v1102 = vld [vmem:[%s3 + $0xd0] sm:$0xff]
        %v1103 = vld [vmem:[%s3 + $0xd8] sm:$0xff]
        %v1104 = vld [vmem:[%s3 + $0xe0] sm:$0xff]
        %v1105 = vld [vmem:[%s3 + $0xe8] sm:$0xff]
        %v1106 = vld [vmem:[%s3 + $0xf0] sm:$0xff]
        %v1107 = vld [vmem:[%s3 + $0xf8] sm:$0xff]
        %v1108 = vld [vmem:[%s4] sm:$0x1]
        %v1110 = vlaneseq
        %v1111 = vshrl.u32 %v1110, 7
        %v1112 = vsub.s32 0, %v1111
        %v1113 = vrot.slane %v1108, %v1112
        %1115 = vmatprep.subr.mxu0 0.0
        %1116 = vmatpush1.msra.mxu0 %v1076
        %1117 = vmatprep.subr.mxu0 0.0
        %1118 = vmatpush1.msra.mxu0 %v1077
        %1119 = vmatprep.subr.mxu0 0.0
        %1120 = vmatpush1.msra.mxu0 %v1078
        %1121 = vmatprep.subr.mxu0 0.0
        %1122 = vmatpush1.msra.mxu0 %v1079
        %1123 = vmatprep.subr.mxu0 0.0
        %1124 = vmatpush1.msra.mxu0 %v1080
        %1125 = vmatprep.subr.mxu0 0.0
        %1126 = vmatpush1.msra.mxu0 %v1081
        %1127 = vmatprep.subr.mxu0 0.0
        %1128 = vmatpush1.msra.mxu0 %v1082
        %1129 = vmatprep.subr.mxu0 0.0
        %1130 = vmatpush1.msra.mxu0 %v1083
        %1131 = vmatprep.subr.mxu0 0.0
        %1132 = vmatpush1.msra.mxu0 %v1084
        %1133 = vmatprep.subr.mxu0 0.0
        %1134 = vmatpush1.msra.mxu0 %v1085
        %1135 = vmatprep.subr.mxu0 0.0
        %1136 = vmatpush1.msra.mxu0 %v1086
        %1137 = vmatprep.subr.mxu0 0.0
        %1138 = vmatpush1.msra.mxu0 %v1087
        %1139 = vmatprep.subr.mxu0 0.0
        %1140 = vmatpush1.msra.mxu0 %v1088
        %1141 = vmatprep.subr.mxu0 0.0
        %1142 = vmatpush1.msra.mxu0 %v1089
        %1143 = vmatprep.subr.mxu0 0.0
        %1144 = vmatpush1.msra.mxu0 %v1090
        %1145 = vmatprep.subr.mxu0 0.0
        %1146 = vmatpush1.msra.mxu0 %v1091
        %1147 = vmatprep.subr.mxu0 0.0
        %1148 = vmatpush1.msra.mxu0 %v1092
        %1149 = vmatprep.subr.mxu0 0.0
        %1150 = vmatpush1.msra.mxu0 %v1093
        %1151 = vmatprep.subr.mxu0 0.0
        %1152 = vmatpush1.msra.mxu0 %v1094
        %1153 = vmatprep.subr.mxu0 0.0
        %1154 = vmatpush1.msra.mxu0 %v1095
        %1155 = vmatprep.subr.mxu0 0.0
        %1156 = vmatpush1.msra.mxu0 %v1096
        %1157 = vmatprep.subr.mxu0 0.0
        %1158 = vmatpush1.msra.mxu0 %v1097
        %1159 = vmatprep.subr.mxu0 0.0
        %1160 = vmatpush1.msra.mxu0 %v1098
        %1161 = vmatprep.subr.mxu0 0.0
        %1162 = vmatpush1.msra.mxu0 %v1099
        %1163 = vmatprep.subr.mxu0 0.0
        %1164 = vmatpush1.msra.mxu0 %v1100
        %1165 = vmatprep.subr.mxu0 0.0
        %1166 = vmatpush1.msra.mxu0 %v1101
        %1167 = vmatprep.subr.mxu0 0.0
        %1168 = vmatpush1.msra.mxu0 %v1102
        %1169 = vmatprep.subr.mxu0 0.0
        %1170 = vmatpush1.msra.mxu0 %v1103
        %1171 = vmatprep.subr.mxu0 0.0
        %1172 = vmatpush1.msra.mxu0 %v1104
        %1173 = vmatprep.subr.mxu0 0.0
        %1174 = vmatpush1.msra.mxu0 %v1105
        %1175 = vmatprep.subr.mxu0 0.0
        %1176 = vmatpush1.msra.mxu0 %v1106
        %1177 = vmatprep.subr.mxu0 0.0
        %1178 = vmatpush1.msra.mxu0 %v1107
        %1179 = vmatprep.mubr.f32.mxu0 %v1069
        %1180 = vmatmul.mubr.f32.gmra.mrb[0].mxu0 %v1068
        %v1181 = vpop.f32.mrb[0].mxu0
        %v1182 = vadd.f32 %v1113, %v1181
        %v1183 = vpop.f32.mrb[0].mxu0
        %1184 = vmatprep.mubr.f32.mxu0 %v1071
        %1185 = vmatmul.mubr.f32.gmra.mrb[0].mxu0 %v1070
        %v1186 = vpop.f32.mrb[0].mxu0
        %v1187 = vadd.f32 %v1113, %v1186
        %v1188 = vpop.f32.mrb[0].mxu0
        %1189 = vmatprep.mubr.f32.mxu0 %v1073
        %1190 = vmatmul.mubr.f32.gmra.mrb[0].mxu0 %v1072
        %v1191 = vpop.f32.mrb[0].mxu0
        %v1192 = vadd.f32 %v1113, %v1191
        %v1193 = vpop.f32.mrb[0].mxu0
        %1194 = vmatprep.mubr.f32.mxu0 %v1075
        %1195 = vmatmul.mubr.f32.gmra.mrb[0].mxu0 %v1074
        %v1196 = vpop.f32.mrb[0].mxu0
        %v1197 = vadd.f32 %v1113, %v1196
        %v1198 = vpop.f32.mrb[0].mxu0
        %1199 = vdwg.mxu0
        %v1200 = vmax.f32 %v1182, 0.0
        %v1201 = vmax.f32 %v1187, 0.0
        %v1202 = vmax.f32 %v1192, 0.0
        %v1203 = vmax.f32 %v1197, 0.0
        %v1204 = vld [vmem:[%s5] sm:$0xff]
        %v1205 = vld [vmem:[%s5 + $0x8] sm:$0xff]
        %v1206 = vld [vmem:[%s5 + $0x10] sm:$0xff]
        %v1207 = vld [vmem:[%s5 + $0x18] sm:$0xff]
        %v1208 = vld [vmem:[%s5 + $0x20] sm:$0xff]
        %v1209 = vld [vmem:[%s5 + $0x28] sm:$0xff]
        %v1210 = vld [vmem:[%s5 + $0x30] sm:$0xff]
        %v1211 = vld [vmem:[%s5 + $0x38] sm:$0xff]
        %v1212 = vld [vmem:[%s6] sm:$0x1]
        %v1214 = vlaneseq
        %v1215 = vshrl.u32 %v1214, 7
        %v1216 = vsub.s32 0, %v1215
        %v1217 = vrot.slane %v1212, %v1216
        %vm1219 = vcmask 523264
        %v1221 = vsel %vm1219, %v1200, 0
        %v1224 = vsel %vm1219, %v1201, 0
        %v1227 = vsel %vm1219, %v1202, 0
        %v1230 = vsel %vm1219, %v1203, 0
        %1232 = vmatprep.subr.mxu0 0.0
        %1233 = vmatpush1.msra.mxu0 %v1204
        %1234 = vmatprep.subr.mxu0 0.0
        %1235 = vmatpush1.msra.mxu0 %v1205
        %1236 = vmatprep.subr.mxu0 0.0
        %1237 = vmatpush1.msra.mxu0 %v1206
        %1238 = vmatprep.subr.mxu0 0.0
        %1239 = vmatpush1.msra.mxu0 %v1207
        %1240 = vmatprep.subr.mxu0 0.0
        %1241 = vmatpush1.msra.mxu0 %v1208
        %1242 = vmatprep.subr.mxu0 0.0
        %1243 = vmatpush1.msra.mxu0 %v1209
        %1244 = vmatprep.subr.mxu0 0.0
        %1245 = vmatpush1.msra.mxu0 %v1210
        %1246 = vmatprep.subr.mxu0 0.0
        %1247 = vmatpush1.msra.mxu0 %v1211
        %1248 = vmatprep.subr.mxu0 0.0
        %1249 = vmatpush1.msra.mxu0 0.0
        %1250 = vmatprep.subr.mxu0 0.0
        %1251 = vmatpush1.msra.mxu0 0.0
        %1252 = vmatprep.subr.mxu0 0.0
        %1253 = vmatpush1.msra.mxu0 0.0
        %1254 = vmatprep.subr.mxu0 0.0
        %1255 = vmatpush1.msra.mxu0 0.0
        %1256 = vmatprep.subr.mxu0 0.0
        %1257 = vmatpush1.msra.mxu0 0.0
        %1258 = vmatprep.subr.mxu0 0.0
        %1259 = vmatpush1.msra.mxu0 0.0
        %1260 = vmatprep.subr.mxu0 0.0
        %1261 = vmatpush1.msra.mxu0 0.0
        %1262 = vmatprep.subr.mxu0 0.0
        %1263 = vmatpush1.msra.mxu0 0.0
        %1264 = vmatprep.subr.mxu0 0.0
        %1265 = vmatpush1.msra.mxu0 0.0
        %1266 = vmatprep.subr.mxu0 0.0
        %1267 = vmatpush1.msra.mxu0 0.0
        %1268 = vmatprep.subr.mxu0 0.0
        %1269 = vmatpush1.msra.mxu0 0.0
        %1270 = vmatprep.subr.mxu0 0.0
        %1271 = vmatpush1.msra.mxu0 0.0
        %1272 = vmatprep.subr.mxu0 0.0
        %1273 = vmatpush1.msra.mxu0 0.0
        %1274 = vmatprep.subr.mxu0 0.0
        %1275 = vmatpush1.msra.mxu0 0.0
        %1276 = vmatprep.subr.mxu0 0.0
        %1277 = vmatpush1.msra.mxu0 0.0
        %1278 = vmatprep.subr.mxu0 0.0
        %1279 = vmatpush1.msra.mxu0 0.0
        %1280 = vmatprep.subr.mxu0 0.0
        %1281 = vmatpush1.msra.mxu0 0.0
        %1282 = vmatprep.subr.mxu0 0.0
        %1283 = vmatpush1.msra.mxu0 0.0
        %1284 = vmatprep.subr.mxu0 0.0
        %1285 = vmatpush1.msra.mxu0 0.0
        %1286 = vmatprep.subr.mxu0 0.0
        %1287 = vmatpush1.msra.mxu0 0.0
        %1288 = vmatprep.subr.mxu0 0.0
        %1289 = vmatpush1.msra.mxu0 0.0
        %1290 = vmatprep.subr.mxu0 0.0
        %1291 = vmatpush1.msra.mxu0 0.0
        %1292 = vmatprep.subr.mxu0 0.0
        %1293 = vmatpush1.msra.mxu0 0.0
        %1294 = vmatprep.subr.mxu0 0.0
        %1295 = vmatpush1.msra.mxu0 0.0
        %1296 = vmatprep.mubr.f32.mxu0 0.0
        %1297 = vmatmul.mubr.f32.gmra.mrb[0].mxu0 %v1221
        %v1298 = vpop.f32.mrb[0].mxu0
        %v1299 = vadd.f32 %v1217, %v1298
        %v1300 = vpop.f32.mrb[0].mxu0
        %1301 = vmatprep.mubr.f32.mxu0 0.0
        %1302 = vmatmul.mubr.f32.gmra.mrb[0].mxu0 %v1224
        %v1303 = vpop.f32.mrb[0].mxu0
        %v1304 = vadd.f32 %v1217, %v1303
        %v1305 = vpop.f32.mrb[0].mxu0
        %1306 = vmatprep.mubr.f32.mxu0 0.0
        %1307 = vmatmul.mubr.f32.gmra.mrb[0].mxu0 %v1227
        %v1308 = vpop.f32.mrb[0].mxu0
        %v1309 = vadd.f32 %v1217, %v1308
        %v1310 = vpop.f32.mrb[0].mxu0
        %1311 = vmatprep.mubr.f32.mxu0 0.0
        %1312 = vmatmul.mubr.f32.gmra.mrb[0].mxu0 %v1230
        %v1313 = vpop.f32.mrb[0].mxu0
        %v1314 = vadd.f32 %v1217, %v1313
        %v1315 = vpop.f32.mrb[0].mxu0
        %1316 = vdwg.mxu0
        %v1317 = vmax.f32 %v1299, 0.0
        %v1318 = vmax.f32 %v1304, 0.0
        %v1319 = vmax.f32 %v1309, 0.0
        %v1320 = vmax.f32 %v1314, 0.0
        %v1321 = vld [vmem:[%s7] sm:$0xff]
        %v1322 = vld [vmem:[%s7 + $0x8] sm:$0xff]
        %v1323 = vld [vmem:[%s8] sm:$0x1]
        %v1325 = vlaneseq
        %v1326 = vshrl.u32 %v1325, 7
        %v1327 = vsub.s32 0, %v1326
        %v1328 = vrot.slane %v1323, %v1327
        %vm1330 = vcmask 130048
        %v1332 = vsel %vm1330, %v1317, 0
        %v1335 = vsel %vm1330, %v1318, 0
        %v1338 = vsel %vm1330, %v1319, 0
        %v1341 = vsel %vm1330, %v1320, 0
        %1343 = vmatprep.subr.mxu0 0.0
        %1344 = vmatpush1.msra.mxu0 %v1321
        %1345 = vmatprep.subr.mxu0 0.0
        %1346 = vmatpush1.msra.mxu0 %v1322
        %1347 = vmatprep.subr.mxu0 0.0
        %1348 = vmatpush1.msra.mxu0 0.0
        %1349 = vmatprep.subr.mxu0 0.0
        %1350 = vmatpush1.msra.mxu0 0.0
        %1351 = vmatprep.subr.mxu0 0.0
        %1352 = vmatpush1.msra.mxu0 0.0
        %1353 = vmatprep.subr.mxu0 0.0
        %1354 = vmatpush1.msra.mxu0 0.0
        %1355 = vmatprep.subr.mxu0 0.0
        %1356 = vmatpush1.msra.mxu0 0.0
        %1357 = vmatprep.subr.mxu0 0.0
        %1358 = vmatpush1.msra.mxu0 0.0
        %1359 = vmatprep.subr.mxu0 0.0
        %1360 = vmatpush1.msra.mxu0 0.0
        %1361 = vmatprep.subr.mxu0 0.0
        %1362 = vmatpush1.msra.mxu0 0.0
        %1363 = vmatprep.subr.mxu0 0.0
        %1364 = vmatpush1.msra.mxu0 0.0
        %1365 = vmatprep.subr.mxu0 0.0
        %1366 = vmatpush1.msra.mxu0 0.0
        %1367 = vmatprep.subr.mxu0 0.0
        %1368 = vmatpush1.msra.mxu0 0.0
        %1369 = vmatprep.subr.mxu0 0.0
        %1370 = vmatpush1.msra.mxu0 0.0
        %1371 = vmatprep.subr.mxu0 0.0
        %1372 = vmatpush1.msra.mxu0 0.0
        %1373 = vmatprep.subr.mxu0 0.0
        %1374 = vmatpush1.msra.mxu0 0.0
        %1375 = vmatprep.subr.mxu0 0.0
        %1376 = vmatpush1.msra.mxu0 0.0
        %1377 = vmatprep.subr.mxu0 0.0
        %1378 = vmatpush1.msra.mxu0 0.0
        %1379 = vmatprep.subr.mxu0 0.0
        %1380 = vmatpush1.msra.mxu0 0.0
        %1381 = vmatprep.subr.mxu0 0.0
        %1382 = vmatpush1.msra.mxu0 0.0
        %1383 = vmatprep.subr.mxu0 0.0
        %1384 = vmatpush1.msra.mxu0 0.0
        %1385 = vmatprep.subr.mxu0 0.0
        %1386 = vmatpush1.msra.mxu0 0.0
        %1387 = vmatprep.subr.mxu0 0.0
        %1388 = vmatpush1.msra.mxu0 0.0
        %1389 = vmatprep.subr.mxu0 0.0
        %1390 = vmatpush1.msra.mxu0 0.0
        %1391 = vmatprep.subr.mxu0 0.0
        %1392 = vmatpush1.msra.mxu0 0.0
        %1393 = vmatprep.subr.mxu0 0.0
        %1394 = vmatpush1.msra.mxu0 0.0
        %1395 = vmatprep.subr.mxu0 0.0
        %1396 = vmatpush1.msra.mxu0 0.0
        %1397 = vmatprep.subr.mxu0 0.0
        %1398 = vmatpush1.msra.mxu0 0.0
        %1399 = vmatprep.subr.mxu0 0.0
        %1400 = vmatpush1.msra.mxu0 0.0
        %1401 = vmatprep.subr.mxu0 0.0
        %1402 = vmatpush1.msra.mxu0 0.0
        %1403 = vmatprep.subr.mxu0 0.0
        %1404 = vmatpush1.msra.mxu0 0.0
        %1405 = vmatprep.subr.mxu0 0.0
        %1406 = vmatpush1.msra.mxu0 0.0
        %1407 = vmatprep.mubr.f32.mxu0 0.0
        %1408 = vmatmul.mubr.f32.gmra.mrb[0].mxu0 %v1332
        %v1409 = vpop.f32.mrb[0].mxu0
        %v1410 = vadd.f32 %v1328, %v1409
        %v1411 = vpop.f32.mrb[0].mxu0
        %1412 = vmatprep.mubr.f32.mxu0 0.0
        %1413 = vmatmul.mubr.f32.gmra.mrb[0].mxu0 %v1335
        %v1414 = vpop.f32.mrb[0].mxu0
        %v1415 = vadd.f32 %v1328, %v1414
        %v1416 = vpop.f32.mrb[0].mxu0
        %1417 = vmatprep.mubr.f32.mxu0 0.0
        %1418 = vmatmul.mubr.f32.gmra.mrb[0].mxu0 %v1338
        %v1419 = vpop.f32.mrb[0].mxu0
        %v1420 = vadd.f32 %v1328, %v1419
        %v1421 = vpop.f32.mrb[0].mxu0
        %1422 = vmatprep.mubr.f32.mxu0 0.0
        %1423 = vmatmul.mubr.f32.gmra.mrb[0].mxu0 %v1341
        %v1424 = vpop.f32.mrb[0].mxu0
        %v1425 = vadd.f32 %v1328, %v1424
        %v1426 = vpop.f32.mrb[0].mxu0
        %1427 = vdwg.mxu0
        %1428 = vst [vmem:[%s343] sm:$0xff] %v1410
        %1429 = vst [vmem:[%s343 + $0x8] sm:$0xff] %v1415
        %1430 = vst [vmem:[%s343 + $0x10] sm:$0xff] %v1420
        %1431 = vst [vmem:[%s343 + $0x18] sm:$0xff] %v1425
        %s1432 = sand.u32 %s226, 1
        %s1433 = scalar_lea.sflag [#allocation4], %s1432
        %s1434 = sand.u32 %s226, 1
        %s1435 = smul.addr %s1434, 32
        %s1436 = scalar_lea.vmem [#allocation5], %s1435
        // Predicated region
        $region61: #{tpu_custom_call.1} parent=55 // pred_check
          %p1437 = pneg %p236
        $region62: #{tpu_custom_call.1} parent=55 // pred_check_branch
          %1439 = sbr.rel (%p1437) target = $region64
        $region63: #{tpu_custom_call.1} parent=55 // pred_region
          %s1440 = smul.u32 4, %s24
          %s1442 = ssub.s32 512, 512
          %1443 = vsyncadd %s1433, %s1442
          %s1444 = smul.addr %s1440, 128
          %s1445 = scalar_lea.hbm %s9, %s1444
          %s1446 = sshll.u32 %s1436, 4
          %s1447 = int_to_ptr.vmem [resolvable:$true] %s1446
          %1452 = dma.vmem_to_hbm [thread:$0]  %s1447, 512, %s1445, %s1433, 128, 128, 8
        $region64: #{tpu_custom_call.1} parent=55 // pred_fallthru
          _
      $region56: #{tpu_custom_call.1} parent=5 // pred_fallthru
        _
      %p1453 = scmp.le.s32.totalorder 2, %s19
      // Predicated region
      $region65: #{tpu_custom_call.1} parent=5 // pred_check
        %p1454 = pneg %p1453
      $region66: #{tpu_custom_call.1} parent=5 // pred_check_branch
        %1456 = sbr.rel (%p1454) target = $region68
      $region67: #{tpu_custom_call.1} parent=5 // pred_region
        %s1457 = ssub.s32 %s19, 2
        // Predicated region
        $region69: #{tpu_custom_call.1} parent=67 // pred_check
          %p1458 = pneg %p242
        $region70: #{tpu_custom_call.1} parent=67 // pred_check_branch
          %1460 = sbr.rel (%p1458) target = $region72
        $region71: #{tpu_custom_call.1} parent=67 // pred_region
          %s1461 = sand.u32 %s227, 1
          %s1462 = scalar_lea.sflag [#allocation4], %s1461
          %s1463 = sand.u32 %s227, 1
          %s1464 = smul.addr %s1463, 32
          %s1465 = scalar_lea.vmem [#allocation5], %s1464
          %1466 = dma.done %s1462, 512
        $region72: #{tpu_custom_call.1} parent=67 // pred_fallthru
          _
      $region68: #{tpu_custom_call.1} parent=5 // pred_fallthru
        _
    $region6: #{tpu_custom_call.1} parent=1 // loop_footer
      %s23 = sadd.s32 1, %s19
    $region7: #{tpu_custom_call.1} parent=1 // loop_footer_branch
      %18 = sbr.rel target = $region3
    $region8: #{tpu_custom_call.1} parent=1 // loop_exit
      _
    %1467 = vsyncpa [#allocation3], 1
    %s1468 = scalar_lea.sflag [#allocation3], 1
    %1469 = vsyncpa %s1468, 1
    %1470 = vsyncpa [#allocation4], 1
    %s1471 = scalar_lea.sflag [#allocation4], 1
    %1472 = vsyncpa %s1471, 1

</llo_original>
